<compile_context>
chip_gen: v7x
topology: tpu7x:2x2x1
jax: 0.10.0
libtpu: 0.0.40
codegen_flags: <defaults>
</compile_context>

<pallas_src>
import jax
import jax.numpy as jnp
from jax.experimental import pallas as pl
from jax.experimental.pallas import tpu as pltpu


def _round_up(x, m):
    return ((x + m - 1) // m) * m


def _vmem_limit(est_bytes):
    # Generous headroom over the estimate, but under v7x's 64 MiB physical VMEM.
    return int(min(max(4 * est_bytes, 32 * 2 ** 20), 48 * 2 ** 20))


# ---------------------------------------------------------------------------
# Layer 0 (all nodes, row-tiled):
#   h0 = relu([feat_self | mean_nbr(feat)] @ W0_fused + b0)
# ---------------------------------------------------------------------------
def _sage_layer0_kernel(nbr_ref, feat_ref, w0_ref, b0_ref, h0_ref):
    TM, K = nbr_ref.shape
    Npad = feat_ref.shape[0]
    row0 = pl.multiple_of(pl.program_id(0) * TM, TM)

    nbrs = nbr_ref[...]                                        # [TM, K]   int32
    feat = feat_ref[...]                                       # [Npad, Dpi] f32

    # Row-normalized one-hot adjacency for this row tile.  Counts accumulate in
    # f32 (exact, VPU-friendly on v5e), cast once to bf16 for the MXU.
    col_ids = jax.lax.broadcasted_iota(jnp.int32, (TM, Npad), 1)
    counts = jnp.zeros((TM, Npad), jnp.float32)
    for k in range(K):                                         # K static & small
        counts = counts + (nbrs[:, k:k + 1] == col_ids).astype(jnp.float32)
    adj = (counts * (1.0 / K)).astype(jnp.bfloat16)            # [TM, Npad] bf16

    agg = jnp.dot(adj, feat.astype(jnp.bfloat16),
                  preferred_element_type=jnp.float32)          # [TM, Dpi] f32

    feat_self = feat_ref[pl.ds(row0, TM), :]                   # [TM, Dpi] f32
    x = jnp.concatenate([feat_self, agg], axis=-1).astype(jnp.bfloat16)  # [TM, 2*Dpi]
    h0 = jnp.dot(x, w0_ref[...], preferred_element_type=jnp.float32) + b0_ref[...]
    h0_ref[...] = jnp.maximum(h0, 0.0)
    # TODO(synk): dropout_rate=0.0 in the reference config, so dropout is a no-op.


# ---------------------------------------------------------------------------
# Layer 1 (target rows only):
#   h1[t] = [h0[t] | mean_{k} h0[nbr[t,k]]] @ W1_fused + b1
# ---------------------------------------------------------------------------
def _sage_layer1_kernel(ti_ref, nbrt_ref, h0_ref, w1_ref, b1_ref, out_ref):
    Tpad, K = nbrt_ref.shape
    Npad = h0_ref.shape[0]

    ti = ti_ref[...]                                           # [Tpad, 1] int32
    nbrs = nbrt_ref[...]                                       # [Tpad, K] int32
    h0 = h0_ref[...].astype(jnp.bfloat16)                      # [Npad, Dpo] bf16

    col_ids = jax.lax.broadcasted_iota(jnp.int32, (Tpad, Npad), 1)

    # Target-row selection as a one-hot matmul (rides the MXU, no gather).
    sel = (ti == col_ids).astype(jnp.bfloat16)                 # [Tpad, Npad]
    h_self = jnp.dot(sel, h0, preferred_element_type=jnp.float32)

    counts = jnp.zeros((Tpad, Npad), jnp.float32)
    for k in range(K):
        counts = counts + (nbrs[:, k:k + 1] == col_ids).astype(jnp.float32)
    adj = (counts * (1.0 / K)).astype(jnp.bfloat16)
    agg = jnp.dot(adj, h0, preferred_element_type=jnp.float32)

    x = jnp.concatenate([h_self, agg], axis=-1).astype(jnp.bfloat16)
    out_ref[...] = jnp.dot(x, w1_ref[...], preferred_element_type=jnp.float32) + b1_ref[...]


def sage_encode_forward(dense_feats, neighbor_indices, target_indices, params,
                        *, block_rows=256):
    """Full SAGEEncode forward. dense_feats: list of [N, d_i] arrays."""
    # FeatureCombiner: concat dense feature blocks (plain-JAX glue).
    feature = jnp.concatenate(dense_feats, axis=-1).astype(jnp.float32)     # [N, Din]
    N, d_in = feature.shape
    d_out = params["w1_self"].shape[1]
    K = neighbor_indices.shape[1]

    # Lane-dense padding + row tiling (zero-padding is exact for the math).
    Dpi = _round_up(d_in, 128)
    Dpo = _round_up(d_out, 128)
    TM = _round_up(min(block_rows, _round_up(N, 8)), 8)
    Npad = _round_up(N, TM)

    feat_p = jnp.pad(feature, ((0, Npad - N), (0, Dpi - d_in)))
    nbr_p = jnp.pad(neighbor_indices.astype(jnp.int32), ((0, Npad - N), (0, 0)))

    def pad2(x, r, c):
        return jnp.pad(x, ((0, r - x.shape[0]), (0, c - x.shape[1])))

    # Fused [self ; neigh] weights, bf16 for the MXU; biases stay f32.
    w0 = jnp.concatenate([pad2(params["w0_self"], Dpi, Dpo),
                          pad2(params["w0_neigh"], Dpi, Dpo)],
                         axis=0).astype(jnp.bfloat16)                       # [2*Dpi, Dpo]
    b0 = pad2(params["b0"], 1, Dpo).astype(jnp.float32)
    w1 = jnp.concatenate([pad2(params["w1_self"], Dpo, Dpo),
                          pad2(params["w1_neigh"], Dpo, Dpo)],
                         axis=0).astype(jnp.bfloat16)                       # [2*Dpo, Dpo]
    b1 = pad2(params["b1"], 1, Dpo).astype(jnp.float32)

    # ---- layer 0: all nodes, row-tiled grid ("parallel" -> megacore on v7x) ----
    grid = (Npad // TM,)
    est0 = (4 * (Npad * Dpi + 2 * TM * Dpo + 2 * TM * K)
            + 2 * (2 * Dpi * Dpo) + 6 * TM * Npad + 4 * Dpo)
    h0 = pl.pallas_call(
        _sage_layer0_kernel,
        out_shape=jax.ShapeDtypeStruct((Npad, Dpo), jnp.float32),
        grid=grid,
        in_specs=[
            pl.BlockSpec((TM, K), lambda i: (i, 0)),          # neighbor tile
            pl.BlockSpec((Npad, Dpi), lambda i: (0, 0)),      # full features (resident)
            pl.BlockSpec((2 * Dpi, Dpo), lambda i: (0, 0)),   # fused W0 (bf16)
            pl.BlockSpec((1, Dpo), lambda i: (0, 0)),         # b0
        ],
        out_specs=pl.BlockSpec((TM, Dpo), lambda i: (i, 0)),
        compiler_params=pltpu.CompilerParams(
            dimension_semantics=("parallel",),
            vmem_limit_bytes=_vmem_limit(est0)),
    )(nbr_p, feat_p, w0, b0)

    # ---- layer 1: only target rows are ever consumed -> compute just those ----
    ti_flat = target_indices.reshape(-1).astype(jnp.int32)
    T = ti_flat.shape[0]
    Tpad = _round_up(T, 8)
    ti_p = jnp.pad(ti_flat, (0, Tpad - T))
    nbr_t = jnp.take(neighbor_indices.astype(jnp.int32), ti_p, axis=0)      # [Tpad, K]

    vmem = pl.BlockSpec(memory_space=pltpu.MemorySpace.VMEM)
    est1 = (4 * (Npad * Dpo + Tpad * (K + 1 + Dpo))
            + 2 * (2 * Dpo * Dpo) + 12 * Tpad * Npad + 4 * Dpo)
    h1_t = pl.pallas_call(
        _sage_layer1_kernel,
        out_shape=jax.ShapeDtypeStruct((Tpad, Dpo), jnp.float32),
        in_specs=[vmem] * 5,
        out_specs=vmem,
        compiler_params=pltpu.CompilerParams(vmem_limit_bytes=_vmem_limit(est1)),
    )(ti_p[:, None], nbr_t, h0, w1, b1)

    # Strip lane/row padding and reshape to ti.shape + (Dout,) (glue).
    return h1_t[:T, :d_out].reshape(target_indices.shape + (d_out,))


def init_params(key, input_dim, output_dim):
    ks = jax.random.split(key, 4)

    def glorot(k, fan_in, fan_out):
        scale = jnp.sqrt(6.0 / (fan_in + fan_out))
        return jax.random.uniform(k, (fan_in, fan_out), jnp.float32, -scale, scale)

    return {
        "w0_self":  glorot(ks[0], input_dim, output_dim),
        "w0_neigh": glorot(ks[1], input_dim, output_dim),
        "b0":       jnp.zeros((1, output_dim), jnp.float32),
        "w1_self":  glorot(ks[2], output_dim, output_dim),
        "w1_neigh": glorot(ks[3], output_dim, output_dim),
        "b1":       jnp.zeros((1, output_dim), jnp.float32),
    }


if __name__ == "__main__":
    key = jax.random.PRNGKey(0)
    k_feat0, k_feat1, k_nbr, k_tgt, k_param = jax.random.split(key, 5)

    # Small shapes consistent with the module.
    dense_feature_dims = [8, 8]          # -> input_dim = 16
    input_dim = sum(dense_feature_dims)
    output_dim = 32
    fanouts = [2, 2]
    N = 64                               # total sampled nodes in the relation graph
    K = fanouts[0]                       # fixed fanout per node

    dense_feats = [
        jax.random.normal(k_feat0, (N, dense_feature_dims[0]), jnp.float32),
        jax.random.normal(k_feat1, (N, dense_feature_dims[1]), jnp.float32),
    ]
    neighbor_indices = jax.random.randint(k_nbr, (N, K), 0, N, jnp.int32)    # relation graph
    target_indices = jax.random.randint(k_tgt, (2, 2), 0, N, jnp.int32)      # ti

    params = init_params(k_param, input_dim, output_dim)

    out = sage_encode_forward(dense_feats, neighbor_indices, target_indices, params)
    out = jax.block_until_ready(out)
    assert out.shape == target_indices.shape + (output_dim,)
    assert out.dtype == jnp.float32
    print("KERNEL_OK")
</pallas_src>

<mosaic_0001>
module attributes {stable_mosaic.version = 11 : i64} {
  func.func @_sage_layer0_kernel(%arg0: i32, %arg1: memref<64x2xi32, #tpu.memory_space<vmem>>, %arg2: memref<64x128xf32, #tpu.memory_space<vmem>>, %arg3: memref<256x128xbf16, #tpu.memory_space<vmem>>, %arg4: memref<1x128xf32, #tpu.memory_space<vmem>>, %arg5: memref<64x128xf32, #tpu.memory_space<vmem>>) attributes {dimension_semantics = [#tpu.dimension_semantics<parallel>], iteration_bounds = array<i64: 1>, scalar_prefetch = 0 : i64, scratch_operands = 0 : i64, tpu.core_type = #tpu.core_type<tc>, window_params = [{transform_indices = @transform_0, window_bounds = array<i64: 64, 2>}, {pipeline_mode = #tpu.pipeline_mode<synchronous>, transform_indices = @transform_1, window_bounds = array<i64: 64, 128>}, {pipeline_mode = #tpu.pipeline_mode<synchronous>, transform_indices = @transform_2, window_bounds = array<i64: 256, 128>}, {pipeline_mode = #tpu.pipeline_mode<synchronous>, transform_indices = @transform_3, window_bounds = array<i64: 1, 128>}, {transform_indices = @transform_4, window_bounds = array<i64: 64, 128>}]} {
    %c64_i32 = arith.constant 64 : i32
    %0 = arith.muli %arg0, %c64_i32 : i32
    %1 = tpu.assume_multiple %0, 64 : i32
    %c0 = arith.constant 0 : index
    %c0_0 = arith.constant 0 : index
    %2 = vector.load %arg1[%c0, %c0_0] : memref<64x2xi32, #tpu.memory_space<vmem>>, vector<64x2xi32>
    %c0_1 = arith.constant 0 : index
    %c0_2 = arith.constant 0 : index
    %3 = vector.load %arg2[%c0_1, %c0_2] : memref<64x128xf32, #tpu.memory_space<vmem>>, vector<64x128xf32>
    %4 = tpu.iota {dimensions = array<i32: 1>} : vector<64x64xi32>
    %cst = arith.constant 0.000000e+00 : f32
    %5 = vector.broadcast %cst : f32 to vector<64x64xf32>
    %6 = vector.extract_strided_slice %2 {offsets = [0, 0], sizes = [64, 1], strides = [1, 1]} : vector<64x2xi32> to vector<64x1xi32>
    %7 = vector.broadcast %6 : vector<64x1xi32> to vector<64x64xi32>
    %8 = arith.cmpi eq, %7, %4 : vector<64x64xi32>
    %9 = arith.extui %8 : vector<64x64xi1> to vector<64x64xi32>
    %10 = arith.sitofp %9 : vector<64x64xi32> to vector<64x64xf32>
    %11 = arith.addf %5, %10 : vector<64x64xf32>
    %12 = vector.extract_strided_slice %2 {offsets = [0, 1], sizes = [64, 1], strides = [1, 1]} : vector<64x2xi32> to vector<64x1xi32>
    %13 = vector.broadcast %12 : vector<64x1xi32> to vector<64x64xi32>
    %14 = arith.cmpi eq, %13, %4 : vector<64x64xi32>
    %15 = arith.extui %14 : vector<64x64xi1> to vector<64x64xi32>
    %16 = arith.sitofp %15 : vector<64x64xi32> to vector<64x64xf32>
    %17 = arith.addf %11, %16 : vector<64x64xf32>
    %cst_3 = arith.constant 5.000000e-01 : f32
    %18 = vector.broadcast %cst_3 : f32 to vector<64x64xf32>
    %19 = arith.mulf %17, %18 : vector<64x64xf32>
    %20 = arith.truncf %19 : vector<64x64xf32> to vector<64x64xbf16>
    %21 = arith.truncf %3 : vector<64x128xf32> to vector<64x128xbf16>
    %cst_4 = arith.constant dense<0.000000e+00> : vector<64x128xf32>
    %22 = tpu.matmul %20, %21, %cst_4 {dimension_numbers = #tpu.dot_dimension_numbers<[1], [0], [0], [1], [0, 0, 1, 1], [], []>} : vector<64x64xbf16>, vector<64x128xbf16>, vector<64x128xf32> -> vector<64x128xf32>
    %23 = arith.index_cast %1 : i32 to index
    %c0_5 = arith.constant 0 : index
    %24 = vector.load %arg2[%23, %c0_5] : memref<64x128xf32, #tpu.memory_space<vmem>>, vector<64x128xf32>
    %25 = tpu.concatenate %24, %22 in 1 : vector<64x128xf32>, vector<64x128xf32> -> vector<64x256xf32>
    %26 = arith.truncf %25 : vector<64x256xf32> to vector<64x256xbf16>
    %c0_6 = arith.constant 0 : index
    %c0_7 = arith.constant 0 : index
    %27 = vector.load %arg3[%c0_6, %c0_7] : memref<256x128xbf16, #tpu.memory_space<vmem>>, vector<256x128xbf16>
    %cst_8 = arith.constant dense<0.000000e+00> : vector<64x128xf32>
    %28 = tpu.matmul %26, %27, %cst_8 {dimension_numbers = #tpu.dot_dimension_numbers<[1], [0], [0], [1], [0, 0, 1, 1], [], []>} : vector<64x256xbf16>, vector<256x128xbf16>, vector<64x128xf32> -> vector<64x128xf32>
    %c0_9 = arith.constant 0 : index
    %c0_10 = arith.constant 0 : index
    %29 = vector.load %arg4[%c0_9, %c0_10] : memref<1x128xf32, #tpu.memory_space<vmem>>, vector<1x128xf32>
    %30 = vector.broadcast %29 : vector<1x128xf32> to vector<64x128xf32>
    %31 = arith.addf %28, %30 : vector<64x128xf32>
    %cst_11 = arith.constant 0.000000e+00 : f32
    %32 = vector.broadcast %cst_11 : f32 to vector<64x128xf32>
    %33 = arith.maximumf %31, %32 : vector<64x128xf32>
    %c0_12 = arith.constant 0 : index
    %c0_13 = arith.constant 0 : index
    %34 = vector.load %arg5[%c0_12, %c0_13] : memref<64x128xf32, #tpu.memory_space<vmem>>, vector<64x128xf32>
    tpu.vector_store %arg5[%c0_12, %c0_13], %33 {strides = array<i32>} : memref<64x128xf32, #tpu.memory_space<vmem>>, vector<64x128xf32>,
    return
  }
  func.func @transform_0(%arg0: i32) -> (i32, i32) {
    %c0_i32 = arith.constant 0 : i32
    %c0_i32_0 = arith.constant 0 : i32
    return %arg0, %c0_i32 : i32, i32
  }
  func.func @transform_1(%arg0: i32) -> (i32, i32) {
    %c0_i32 = arith.constant 0 : i32
    %c0_i32_0 = arith.constant 0 : i32
    %c0_i32_1 = arith.constant 0 : i32
    return %c0_i32, %c0_i32_0 : i32, i32
  }
  func.func @transform_2(%arg0: i32) -> (i32, i32) {
    %c0_i32 = arith.constant 0 : i32
    %c0_i32_0 = arith.constant 0 : i32
    %c0_i32_1 = arith.constant 0 : i32
    return %c0_i32, %c0_i32_0 : i32, i32
  }
  func.func @transform_3(%arg0: i32) -> (i32, i32) {
    %c0_i32 = arith.constant 0 : i32
    %c0_i32_0 = arith.constant 0 : i32
    %c0_i32_1 = arith.constant 0 : i32
    return %c0_i32, %c0_i32_0 : i32, i32
  }
  func.func @transform_4(%arg0: i32) -> (i32, i32) {
    %c0_i32 = arith.constant 0 : i32
    %c0_i32_0 = arith.constant 0 : i32
    return %arg0, %c0_i32 : i32, i32
  }
}

</mosaic_0001>

<llo_original>
// kernel: tpu_custom_call.1
$region0: #{tpu_custom_call.1}
  #allocation0 [shape = 'u32[]', space=smem, size = 0x4, offset = 0x4, fixed_abs, tag = 'smem constant byte address 0x4 - core index']
  #allocation1 [shape = 'u32[144,128]{1,0:T(1,128)}', space=vmem, size = 0x12000, scoped, tag = 'internal scratch']
  %s0 = inlined_call_operand.vmem [shape: s32[64,2], index: 0, kind: input, shape index: {}]
  %s1 = inlined_call_operand.vmem [shape: f32[64,128], index: 1, kind: input, shape index: {}]
  %s2 = inlined_call_operand.hbm [shape: bf16[256,128], index: 2, kind: input, shape index: {}]
  %s3 = inlined_call_operand.vmem [shape: f32[1,128], index: 3, kind: input, shape index: {}]
  %s4 = inlined_call_operand.hbm [shape: f32[64,128], index: 4, kind: output, shape index: {}]
  %s5 = sld [smem:[#allocation0]]
  $region30: #{tpu_custom_call.1} parent=0
    _
  %s7 = ssub.s32 1, %s5
  %s8 = scalar_select 0, %s7, %s5
  $region1: #{tpu_custom_call.1} parent=0
    #allocation2 [shape = 'u8[65536]{0}', space=vmem, size = 0x10000, scoped, tag = 'input window, operand 2, single buffered']
    #allocation3 [shape = 's32[1]{0}', space=sflag, size = 0x4, scoped, tag = 'scoped memory for tpu_custom_call.1']
    #allocation4 [shape = 's32[1]{0}', space=sflag, size = 0x4, scoped, tag = 'scoped memory for tpu_custom_call.1']
    #allocation5 [shape = 'u8[32768]{0}', space=vmem, size = 0x8000, scoped, tag = 'output window, operand 0, single buffered']
    %9 = vsyncpa [#allocation3], 0
    %10 = vsyncpa [#allocation4], 0
    // Predicated region
    $region2: #{tpu_custom_call.1} parent=1 // pred_check
      _
    $region3: #{tpu_custom_call.1} parent=1 // pred_check_branch
      %12 = sbr.rel (0) target = $region5
    $region4: #{tpu_custom_call.1} parent=1 // pred_region
      _
    $region5: #{tpu_custom_call.1} parent=1 // pred_fallthru
      _
    // Predicated region
    $region6: #{tpu_custom_call.1} parent=1 // pred_check
      _
    $region7: #{tpu_custom_call.1} parent=1 // pred_check_branch
      %14 = sbr.rel (0) target = $region9
    $region8: #{tpu_custom_call.1} parent=1 // pred_region
      _
    $region9: #{tpu_custom_call.1} parent=1 // pred_fallthru
      _
    // Predicated region
    $region10: #{tpu_custom_call.1} parent=1 // pred_check
      _
    $region11: #{tpu_custom_call.1} parent=1 // pred_check_branch
      %16 = sbr.rel (0) target = $region13
    $region12: #{tpu_custom_call.1} parent=1 // pred_region
      %s18 = ssub.s32 2048, 2048
      %19 = vsyncadd [#allocation3], %s18
      %s20 = sshll.u32 [#allocation2], 4
      %s21 = int_to_ptr.vmem [resolvable:$true] %s20
      %26 = dma.hbm_to_vmem [thread:$0]  %s2, 2048, %s21, [#allocation3], 64, 64, 4
    $region13: #{tpu_custom_call.1} parent=1 // pred_fallthru
      _
    // Predicated region
    $region14: #{tpu_custom_call.1} parent=1 // pred_check
      _
    $region15: #{tpu_custom_call.1} parent=1 // pred_check_branch
      %28 = sbr.rel (0) target = $region17
    $region16: #{tpu_custom_call.1} parent=1 // pred_region
      _
    $region17: #{tpu_custom_call.1} parent=1 // pred_fallthru
      _
    // Predicated region
    $region18: #{tpu_custom_call.1} parent=1 // pred_check
      _
    $region19: #{tpu_custom_call.1} parent=1 // pred_check_branch
      %30 = sbr.rel (0) target = $region21
    $region20: #{tpu_custom_call.1} parent=1 // pred_region
      %31 = dma.done [#allocation3], 2048
    $region21: #{tpu_custom_call.1} parent=1 // pred_fallthru
      _
    %s33 = smul.u32 0, 64
    %v34 = vld [vmem:[%s0] sm:$0xff]
    %v35 = vld [vmem:[%s0 + $0x8] sm:$0xff]
    %v36 = vld [vmem:[%s0 + $0x10] sm:$0xff]
    %v37 = vld [vmem:[%s0 + $0x18] sm:$0xff]
    %v38 = vld [vmem:[%s0 + $0x20] sm:$0xff]
    %v39 = vld [vmem:[%s0 + $0x28] sm:$0xff]
    %v40 = vld [vmem:[%s0 + $0x30] sm:$0xff]
    %v41 = vld [vmem:[%s0 + $0x38] sm:$0xff]
    %v42 = vld [vmem:[%s1] sm:$0xff]
    %v43 = vld [vmem:[%s1 + $0x8] sm:$0xff]
    %v44 = vld [vmem:[%s1 + $0x10] sm:$0xff]
    %v45 = vld [vmem:[%s1 + $0x18] sm:$0xff]
    %v46 = vld [vmem:[%s1 + $0x20] sm:$0xff]
    %v47 = vld [vmem:[%s1 + $0x28] sm:$0xff]
    %v48 = vld [vmem:[%s1 + $0x30] sm:$0xff]
    %v49 = vld [vmem:[%s1 + $0x38] sm:$0xff]
    %v50 = vlaneseq
    %v51 = vand.u32 %v50, 127
    %52 = vset.pattern.permute.xlu0 0
    %53 = vperm.xlu0 %52, %v34
    %v54 = vpop.permute.xlu0 %53
    %55 = vset.pattern.permute.xlu0 0
    %56 = vperm.xlu0 %55, %v35
    %v57 = vpop.permute.xlu0 %56
    %58 = vset.pattern.permute.xlu0 0
    %59 = vperm.xlu0 %58, %v36
    %v60 = vpop.permute.xlu0 %59
    %61 = vset.pattern.permute.xlu0 0
    %62 = vperm.xlu0 %61, %v37
    %v63 = vpop.permute.xlu0 %62
    %64 = vset.pattern.permute.xlu0 0
    %65 = vperm.xlu0 %64, %v38
    %v66 = vpop.permute.xlu0 %65
    %67 = vset.pattern.permute.xlu0 0
    %68 = vperm.xlu0 %67, %v39
    %v69 = vpop.permute.xlu0 %68
    %70 = vset.pattern.permute.xlu0 0
    %71 = vperm.xlu0 %70, %v40
    %v72 = vpop.permute.xlu0 %71
    %73 = vset.pattern.permute.xlu0 0
    %74 = vperm.xlu0 %73, %v41
    %v75 = vpop.permute.xlu0 %74
    %vm76 = vcmp.eq.s32.totalorder %v54, %v51
    %vm77 = vcmp.eq.s32.totalorder %v57, %v51
    %vm78 = vcmp.eq.s32.totalorder %v60, %v51
    %vm79 = vcmp.eq.s32.totalorder %v63, %v51
    %vm80 = vcmp.eq.s32.totalorder %v66, %v51
    %vm81 = vcmp.eq.s32.totalorder %v69, %v51
    %vm82 = vcmp.eq.s32.totalorder %v72, %v51
    %vm83 = vcmp.eq.s32.totalorder %v75, %v51
    %v84 = vsel %vm76, 1, 0
    %v85 = vsel %vm77, 1, 0
    %v86 = vsel %vm78, 1, 0
    %v87 = vsel %vm79, 1, 0
    %v88 = vsel %vm80, 1, 0
    %v89 = vsel %vm81, 1, 0
    %v90 = vsel %vm82, 1, 0
    %v91 = vsel %vm83, 1, 0
    %v92 = vcvt.s32.f32 %v84
    %v93 = vcvt.s32.f32 %v85
    %v94 = vcvt.s32.f32 %v86
    %v95 = vcvt.s32.f32 %v87
    %v96 = vcvt.s32.f32 %v88
    %v97 = vcvt.s32.f32 %v89
    %v98 = vcvt.s32.f32 %v90
    %v99 = vcvt.s32.f32 %v91
    %v100 = vadd.f32 %v92, 0.0
    %v101 = vadd.f32 %v93, 0.0
    %v102 = vadd.f32 %v94, 0.0
    %v103 = vadd.f32 %v95, 0.0
    %v104 = vadd.f32 %v96, 0.0
    %v105 = vadd.f32 %v97, 0.0
    %v106 = vadd.f32 %v98, 0.0
    %v107 = vadd.f32 %v99, 0.0
    %108 = vset.pattern.permute.xlu0 1
    %109 = vperm.xlu0 %108, %v34
    %v110 = vpop.permute.xlu0 %109
    %111 = vset.pattern.permute.xlu0 1
    %112 = vperm.xlu0 %111, %v35
    %v113 = vpop.permute.xlu0 %112
    %114 = vset.pattern.permute.xlu0 1
    %115 = vperm.xlu0 %114, %v36
    %v116 = vpop.permute.xlu0 %115
    %117 = vset.pattern.permute.xlu0 1
    %118 = vperm.xlu0 %117, %v37
    %v119 = vpop.permute.xlu0 %118
    %120 = vset.pattern.permute.xlu0 1
    %121 = vperm.xlu0 %120, %v38
    %v122 = vpop.permute.xlu0 %121
    %123 = vset.pattern.permute.xlu0 1
    %124 = vperm.xlu0 %123, %v39
    %v125 = vpop.permute.xlu0 %124
    %126 = vset.pattern.permute.xlu0 1
    %127 = vperm.xlu0 %126, %v40
    %v128 = vpop.permute.xlu0 %127
    %129 = vset.pattern.permute.xlu0 1
    %130 = vperm.xlu0 %129, %v41
    %v131 = vpop.permute.xlu0 %130
    %vm132 = vcmp.eq.s32.totalorder %v110, %v51
    %vm133 = vcmp.eq.s32.totalorder %v113, %v51
    %vm134 = vcmp.eq.s32.totalorder %v116, %v51
    %vm135 = vcmp.eq.s32.totalorder %v119, %v51
    %vm136 = vcmp.eq.s32.totalorder %v122, %v51
    %vm137 = vcmp.eq.s32.totalorder %v125, %v51
    %vm138 = vcmp.eq.s32.totalorder %v128, %v51
    %vm139 = vcmp.eq.s32.totalorder %v131, %v51
    %v140 = vsel %vm132, 1, 0
    %v141 = vsel %vm133, 1, 0
    %v142 = vsel %vm134, 1, 0
    %v143 = vsel %vm135, 1, 0
    %v144 = vsel %vm136, 1, 0
    %v145 = vsel %vm137, 1, 0
    %v146 = vsel %vm138, 1, 0
    %v147 = vsel %vm139, 1, 0
    %v148 = vcvt.s32.f32 %v140
    %v149 = vcvt.s32.f32 %v141
    %v150 = vcvt.s32.f32 %v142
    %v151 = vcvt.s32.f32 %v143
    %v152 = vcvt.s32.f32 %v144
    %v153 = vcvt.s32.f32 %v145
    %v154 = vcvt.s32.f32 %v146
    %v155 = vcvt.s32.f32 %v147
    %v156 = vadd.f32 %v100, %v148
    %v157 = vadd.f32 %v101, %v149
    %v158 = vadd.f32 %v102, %v150
    %v159 = vadd.f32 %v103, %v151
    %v160 = vadd.f32 %v104, %v152
    %v161 = vadd.f32 %v105, %v153
    %v162 = vadd.f32 %v106, %v154
    %v163 = vadd.f32 %v107, %v155
    %v164 = vmul.f32 %v156, 0.5
    %v165 = vmul.f32 %v157, 0.5
    %v166 = vmul.f32 %v158, 0.5
    %v167 = vmul.f32 %v159, 0.5
    %v168 = vmul.f32 %v160, 0.5
    %v169 = vmul.f32 %v161, 0.5
    %v170 = vmul.f32 %v162, 0.5
    %v171 = vmul.f32 %v163, 0.5
    %v172 = vpack.c.bf16 %v165, %v164
    %v173 = vpack.c.bf16 %v167, %v166
    %v174 = vpack.c.bf16 %v169, %v168
    %v175 = vpack.c.bf16 %v171, %v170
    %v176 = vpack.c.bf16 %v43, %v42
    %v177 = vpack.c.bf16 %v45, %v44
    %v178 = vpack.c.bf16 %v47, %v46
    %v179 = vpack.c.bf16 %v49, %v48
    %vm180 = vcmask 523264
    %v182 = vsel %vm180, %v172, 0
    %v185 = vsel %vm180, %v173, 0
    %v188 = vsel %vm180, %v174, 0
    %v191 = vsel %vm180, %v175, 0
    %193 = vmatprep.subr.bf16.mxu0 0
    %194 = vmatpush1.bf16.msra.mxu0 %v176
    %195 = vmatprep.subr.bf16.mxu0 0
    %196 = vmatpush1.bf16.msra.mxu0 %v177
    %197 = vmatprep.subr.bf16.mxu0 0
    %198 = vmatpush1.bf16.msra.mxu0 %v178
    %199 = vmatprep.subr.bf16.mxu0 0
    %200 = vmatpush1.bf16.msra.mxu0 %v179
    %201 = vmatprep.subr.bf16.mxu0 0
    %202 = vmatpush1.bf16.msra.mxu0 0
    %203 = vmatprep.subr.bf16.mxu0 0
    %204 = vmatpush1.bf16.msra.mxu0 0
    %205 = vmatprep.subr.bf16.mxu0 0
    %206 = vmatpush1.bf16.msra.mxu0 0
    %207 = vmatprep.subr.bf16.mxu0 0
    %208 = vmatpush1.bf16.msra.mxu0 0
    %209 = vmatprep.subr.bf16.mxu0 0
    %210 = vmatpush1.bf16.msra.mxu0 0
    %211 = vmatprep.subr.bf16.mxu0 0
    %212 = vmatpush1.bf16.msra.mxu0 0
    %213 = vmatprep.subr.bf16.mxu0 0
    %214 = vmatpush1.bf16.msra.mxu0 0
    %215 = vmatprep.subr.bf16.mxu0 0
    %216 = vmatpush1.bf16.msra.mxu0 0
    %217 = vmatprep.subr.bf16.mxu0 0
    %218 = vmatpush1.bf16.msra.mxu0 0
    %219 = vmatprep.subr.bf16.mxu0 0
    %220 = vmatpush1.bf16.msra.mxu0 0
    %221 = vmatprep.subr.bf16.mxu0 0
    %222 = vmatpush1.bf16.msra.mxu0 0
    %223 = vmatprep.subr.bf16.mxu0 0
    %224 = vmatpush1.bf16.msra.mxu0 0
    %225 = vmatprep.mubr.bf16.mxu0 0
    %226 = vmatmul.mubr.bf16.gmra.mrb[0].mxu0 %v182
    %v227 = vpop.f32.mrb[0].mxu0
    %v228 = vadd.f32 0.0, %v227
    %v229 = vpop.f32.mrb[0].mxu0
    %v230 = vpop.f32.mrb[0].mxu0
    %v231 = vadd.f32 0.0, %v230
    %v232 = vpop.f32.mrb[0].mxu0
    %233 = vmatprep.mubr.bf16.mxu0 0
    %234 = vmatmul.mubr.bf16.gmra.mrb[0].mxu0 %v185
    %v235 = vpop.f32.mrb[0].mxu0
    %v236 = vadd.f32 0.0, %v235
    %v237 = vpop.f32.mrb[0].mxu0
    %v238 = vpop.f32.mrb[0].mxu0
    %v239 = vadd.f32 0.0, %v238
    %v240 = vpop.f32.mrb[0].mxu0
    %241 = vmatprep.mubr.bf16.mxu0 0
    %242 = vmatmul.mubr.bf16.gmra.mrb[0].mxu0 %v188
    %v243 = vpop.f32.mrb[0].mxu0
    %v244 = vadd.f32 0.0, %v243
    %v245 = vpop.f32.mrb[0].mxu0
    %v246 = vpop.f32.mrb[0].mxu0
    %v247 = vadd.f32 0.0, %v246
    %v248 = vpop.f32.mrb[0].mxu0
    %249 = vmatprep.mubr.bf16.mxu0 0
    %250 = vmatmul.mubr.bf16.gmra.mrb[0].mxu0 %v191
    %v251 = vpop.f32.mrb[0].mxu0
    %v252 = vadd.f32 0.0, %v251
    %v253 = vpop.f32.mrb[0].mxu0
    %v254 = vpop.f32.mrb[0].mxu0
    %v255 = vadd.f32 0.0, %v254
    %v256 = vpop.f32.mrb[0].mxu0
    %257 = vdwg.mxu0
    %s258 = scalar_lea.vmem %s1, %s33
    %v259 = vld [vmem:[%s258] sm:$0xff]
    %v260 = vld [vmem:[%s258 + $0x8] sm:$0xff]
    %v261 = vld [vmem:[%s258 + $0x10] sm:$0xff]
    %v262 = vld [vmem:[%s258 + $0x18] sm:$0xff]
    %v263 = vld [vmem:[%s258 + $0x20] sm:$0xff]
    %v264 = vld [vmem:[%s258 + $0x28] sm:$0xff]
    %v265 = vld [vmem:[%s258 + $0x30] sm:$0xff]
    %v266 = vld [vmem:[%s258 + $0x38] sm:$0xff]
    %v267 = vpack.c.bf16 %v260, %v259
    %v268 = vpack.c.bf16 %v231, %v228
    %v269 = vpack.c.bf16 %v262, %v261
    %v270 = vpack.c.bf16 %v239, %v236
    %v271 = vpack.c.bf16 %v264, %v263
    %v272 = vpack.c.bf16 %v247, %v244
    %v273 = vpack.c.bf16 %v266, %v265
    %v274 = vpack.c.bf16 %v255, %v252
    %v275 = vld [vmem:[#allocation2] sm:$0xf]
    %v276 = vld [vmem:[#allocation2 + $0x4] sm:$0xf]
    %v277 = vld [vmem:[#allocation2 + $0x8] sm:$0xf]
    %v278 = vld [vmem:[#allocation2 + $0xc] sm:$0xf]
    %v279 = vld [vmem:[#allocation2 + $0x10] sm:$0xf]
    %v280 = vld [vmem:[#allocation2 + $0x14] sm:$0xf]
    %v281 = vld [vmem:[#allocation2 + $0x18] sm:$0xf]
    %v282 = vld [vmem:[#allocation2 + $0x1c] sm:$0xf]
    %v283 = vld [vmem:[#allocation2 + $0x20] sm:$0xf]
    %v284 = vld [vmem:[#allocation2 + $0x24] sm:$0xf]
    %v285 = vld [vmem:[#allocation2 + $0x28] sm:$0xf]
    %v286 = vld [vmem:[#allocation2 + $0x2c] sm:$0xf]
    %v287 = vld [vmem:[#allocation2 + $0x30] sm:$0xf]
    %v288 = vld [vmem:[#allocation2 + $0x34] sm:$0xf]
    %v289 = vld [vmem:[#allocation2 + $0x38] sm:$0xf]
    %v290 = vld [vmem:[#allocation2 + $0x3c] sm:$0xf]
    %v291 = vld [vmem:[#allocation2 + $0x40] sm:$0xf]
    %v292 = vld [vmem:[#allocation2 + $0x44] sm:$0xf]
    %v293 = vld [vmem:[#allocation2 + $0x48] sm:$0xf]
    %v294 = vld [vmem:[#allocation2 + $0x4c] sm:$0xf]
    %v295 = vld [vmem:[#allocation2 + $0x50] sm:$0xf]
    %v296 = vld [vmem:[#allocation2 + $0x54] sm:$0xf]
    %v297 = vld [vmem:[#allocation2 + $0x58] sm:$0xf]
    %v298 = vld [vmem:[#allocation2 + $0x5c] sm:$0xf]
    %v299 = vld [vmem:[#allocation2 + $0x60] sm:$0xf]
    %v300 = vld [vmem:[#allocation2 + $0x64] sm:$0xf]
    %v301 = vld [vmem:[#allocation2 + $0x68] sm:$0xf]
    %v302 = vld [vmem:[#allocation2 + $0x6c] sm:$0xf]
    %v303 = vld [vmem:[#allocation2 + $0x70] sm:$0xf]
    %v304 = vld [vmem:[#allocation2 + $0x74] sm:$0xf]
    %v305 = vld [vmem:[#allocation2 + $0x78] sm:$0xf]
    %v306 = vld [vmem:[#allocation2 + $0x7c] sm:$0xf]
    %v307 = vld [vmem:[%s3] sm:$0x1]
    %v309 = vlaneseq
    %v310 = vshrl.u32 %v309, 7
    %v311 = vsub.s32 0, %v310
    %v312 = vrot.slane %v307, %v311
    %v346 = vunpack.c.l.b16 %v275
    %v347 = vunpack.c.l.b16 %v276
    %v348 = vunpack.c.l.b16 %v277
    %v349 = vunpack.c.l.b16 %v278
    %v350 = vunpack.c.l.b16 %v279
    %v351 = vunpack.c.l.b16 %v280
    %v352 = vunpack.c.l.b16 %v281
    %v353 = vunpack.c.l.b16 %v282
    %v354 = vunpack.c.l.b16 %v283
    %v355 = vunpack.c.l.b16 %v284
    %v356 = vunpack.c.l.b16 %v285
    %v357 = vunpack.c.l.b16 %v286
    %v358 = vunpack.c.l.b16 %v287
    %v359 = vunpack.c.l.b16 %v288
    %v360 = vunpack.c.l.b16 %v289
    %v361 = vunpack.c.l.b16 %v290
    %v362 = vunpack.c.l.b16 %v291
    %v363 = vunpack.c.l.b16 %v292
    %v364 = vunpack.c.l.b16 %v293
    %v365 = vunpack.c.l.b16 %v294
    %v366 = vunpack.c.l.b16 %v295
    %v367 = vunpack.c.l.b16 %v296
    %v368 = vunpack.c.l.b16 %v297
    %v369 = vunpack.c.l.b16 %v298
    %v370 = vunpack.c.l.b16 %v299
    %v371 = vunpack.c.l.b16 %v300
    %v372 = vunpack.c.l.b16 %v301
    %v373 = vunpack.c.l.b16 %v302
    %v374 = vunpack.c.l.b16 %v303
    %v375 = vunpack.c.l.b16 %v304
    %v376 = vunpack.c.l.b16 %v305
    %v377 = vunpack.c.l.b16 %v306
    %v378 = vpack.c.b16 %v347, %v346
    %v379 = vpack.c.b16 %v349, %v348
    %v380 = vpack.c.b16 %v351, %v350
    %v381 = vpack.c.b16 %v353, %v352
    %v382 = vpack.c.b16 %v355, %v354
    %v383 = vpack.c.b16 %v357, %v356
    %v384 = vpack.c.b16 %v359, %v358
    %v385 = vpack.c.b16 %v361, %v360
    %v386 = vpack.c.b16 %v363, %v362
    %v387 = vpack.c.b16 %v365, %v364
    %v388 = vpack.c.b16 %v367, %v366
    %v389 = vpack.c.b16 %v369, %v368
    %v390 = vpack.c.b16 %v371, %v370
    %v391 = vpack.c.b16 %v373, %v372
    %v392 = vpack.c.b16 %v375, %v374
    %v393 = vpack.c.b16 %v377, %v376
    %410 = vmatprep.subr.bf16.mxu0 0
    %411 = vmatpush1.bf16.msra.mxu0 %v378
    %412 = vmatprep.subr.bf16.mxu0 0
    %413 = vmatpush1.bf16.msra.mxu0 %v379
    %414 = vmatprep.subr.bf16.mxu0 0
    %415 = vmatpush1.bf16.msra.mxu0 %v380
    %416 = vmatprep.subr.bf16.mxu0 0
    %417 = vmatpush1.bf16.msra.mxu0 %v381
    %418 = vmatprep.subr.bf16.mxu0 0
    %419 = vmatpush1.bf16.msra.mxu0 %v382
    %420 = vmatprep.subr.bf16.mxu0 0
    %421 = vmatpush1.bf16.msra.mxu0 %v383
    %422 = vmatprep.subr.bf16.mxu0 0
    %423 = vmatpush1.bf16.msra.mxu0 %v384
    %424 = vmatprep.subr.bf16.mxu0 0
    %425 = vmatpush1.bf16.msra.mxu0 %v385
    %426 = vmatprep.subr.bf16.mxu0 0
    %427 = vmatpush1.bf16.msra.mxu0 %v386
    %428 = vmatprep.subr.bf16.mxu0 0
    %429 = vmatpush1.bf16.msra.mxu0 %v387
    %430 = vmatprep.subr.bf16.mxu0 0
    %431 = vmatpush1.bf16.msra.mxu0 %v388
    %432 = vmatprep.subr.bf16.mxu0 0
    %433 = vmatpush1.bf16.msra.mxu0 %v389
    %434 = vmatprep.subr.bf16.mxu0 0
    %435 = vmatpush1.bf16.msra.mxu0 %v390
    %436 = vmatprep.subr.bf16.mxu0 0
    %437 = vmatpush1.bf16.msra.mxu0 %v391
    %438 = vmatprep.subr.bf16.mxu0 0
    %439 = vmatpush1.bf16.msra.mxu0 %v392
    %440 = vmatprep.subr.bf16.mxu0 0
    %441 = vmatpush1.bf16.msra.mxu0 %v393
    %442 = vmatprep.mubr.bf16.mxu0 %v268
    %443 = vmatmul.mubr.bf16.gmra.mrb[0].mxu0 %v267
    %v444 = vpop.f32.mrb[0].mxu0
    %v445 = vadd.f32 %v312, %v444
    %v446 = vpop.f32.mrb[0].mxu0
    %v447 = vpop.f32.mrb[0].mxu0
    %v448 = vadd.f32 %v312, %v447
    %v449 = vpop.f32.mrb[0].mxu0
    %450 = vmatprep.mubr.bf16.mxu0 %v270
    %451 = vmatmul.mubr.bf16.gmra.mrb[0].mxu0 %v269
    %v452 = vpop.f32.mrb[0].mxu0
    %v453 = vadd.f32 %v312, %v452
    %v454 = vpop.f32.mrb[0].mxu0
    %v455 = vpop.f32.mrb[0].mxu0
    %v456 = vadd.f32 %v312, %v455
    %v457 = vpop.f32.mrb[0].mxu0
    %458 = vmatprep.mubr.bf16.mxu0 %v272
    %459 = vmatmul.mubr.bf16.gmra.mrb[0].mxu0 %v271
    %v460 = vpop.f32.mrb[0].mxu0
    %v461 = vadd.f32 %v312, %v460
    %v462 = vpop.f32.mrb[0].mxu0
    %v463 = vpop.f32.mrb[0].mxu0
    %v464 = vadd.f32 %v312, %v463
    %v465 = vpop.f32.mrb[0].mxu0
    %466 = vmatprep.mubr.bf16.mxu0 %v274
    %467 = vmatmul.mubr.bf16.gmra.mrb[0].mxu0 %v273
    %v468 = vpop.f32.mrb[0].mxu0
    %v469 = vadd.f32 %v312, %v468
    %v470 = vpop.f32.mrb[0].mxu0
    %v471 = vpop.f32.mrb[0].mxu0
    %v472 = vadd.f32 %v312, %v471
    %v473 = vpop.f32.mrb[0].mxu0
    %474 = vdwg.mxu0
    %v475 = vmax.f32 %v445, 0.0
    %v476 = vmax.f32 %v448, 0.0
    %v477 = vmax.f32 %v453, 0.0
    %v478 = vmax.f32 %v456, 0.0
    %v479 = vmax.f32 %v461, 0.0
    %v480 = vmax.f32 %v464, 0.0
    %v481 = vmax.f32 %v469, 0.0
    %v482 = vmax.f32 %v472, 0.0
    %483 = vst [vmem:[#allocation5] sm:$0xff] %v475
    %484 = vst [vmem:[#allocation5 + $0x8] sm:$0xff] %v476
    %485 = vst [vmem:[#allocation5 + $0x10] sm:$0xff] %v477
    %486 = vst [vmem:[#allocation5 + $0x18] sm:$0xff] %v478
    %487 = vst [vmem:[#allocation5 + $0x20] sm:$0xff] %v479
    %488 = vst [vmem:[#allocation5 + $0x28] sm:$0xff] %v480
    %489 = vst [vmem:[#allocation5 + $0x30] sm:$0xff] %v481
    %490 = vst [vmem:[#allocation5 + $0x38] sm:$0xff] %v482
    // Predicated region
    $region22: #{tpu_custom_call.1} parent=1 // pred_check
      _
    $region23: #{tpu_custom_call.1} parent=1 // pred_check_branch
      %492 = sbr.rel (0) target = $region25
    $region24: #{tpu_custom_call.1} parent=1 // pred_region
      %s494 = ssub.s32 1024, 1024
      %495 = vsyncadd [#allocation4], %s494
      %s496 = sshll.u32 [#allocation5], 4
      %s497 = int_to_ptr.vmem [resolvable:$true] %s496
      %502 = dma.vmem_to_hbm [thread:$0]  %s497, 1024, %s4, [#allocation4], 128, 128, 8
    $region25: #{tpu_custom_call.1} parent=1 // pred_fallthru
      _
    // Predicated region
    $region26: #{tpu_custom_call.1} parent=1 // pred_check
      _
    $region27: #{tpu_custom_call.1} parent=1 // pred_check_branch
      %504 = sbr.rel (0) target = $region29
    $region28: #{tpu_custom_call.1} parent=1 // pred_region
      %505 = dma.done [#allocation4], 1024
    $region29: #{tpu_custom_call.1} parent=1 // pred_fallthru
      _
    %506 = vsyncpa [#allocation3], 1
    %507 = vsyncpa [#allocation4], 1

</llo_original>
